<compile_context>
chip_gen: v7x
topology: tpu7x:2x2x1
jax: 0.10.0
libtpu: 0.0.40
codegen_flags: <defaults>
</compile_context>

<pallas_src>
import numpy as np
import jax
import jax.numpy as jnp
from jax.experimental import pallas as pl
from jax.experimental.pallas import tpu as pltpu

# ---- synthetic config (small sizes consistent with the module) ----
IN_CH       = 64    # in_channels (ROI feature dim)
HIDDEN_DIM  = 32    # CONTEXT_HIDDEN_DIM
POOLING_DIM = 64    # CONTEXT_POOLING_DIM == MLP_HEAD_DIM -> union_single_not_match = False
NUM_OBJ_CLS = 16    # ROI_BOX_HEAD.NUM_CLASSES
NUM_REL_CLS = 16    # ROI_RELATION_HEAD.NUM_CLASSES
USE_BIAS    = True  # USE_FREQUENCY_BIAS
USE_VISION  = True  # PREDICT_USE_VISION (module requires True)

LANE          = 128
EDGE_OFF      = NUM_OBJ_CLS + HIDDEN_DIM        # column where edge_rep starts in the slab
NUM_PAIR      = NUM_OBJ_CLS * NUM_OBJ_CLS       # frequency-bias table rows
ROW_BLOCK_MAX = 2048                            # ~2.5 MiB double-buffered working set at this size
VMEM_LIMIT    = 32 * 1024 * 1024


def _round_up(x, m):
    return ((x + m - 1) // m) * m


def _row_block(n):
    # ~ceil(n/2) rows per block so the grid has >= 2 steps (v7x has 2 TCs and
    # dimension_semantics=("parallel",) shards the row axis across them), capped
    # at ROW_BLOCK_MAX so the per-step working set stays comfortably in VMEM.
    blk = _round_up(max(1, (n + 1) // 2), 8)
    return max(8, min(ROW_BLOCK_MAX, blk))


def _pad_rows(x, multiple):
    pad = (-x.shape[0]) % multiple
    if pad:
        x = jnp.pad(x, ((0, pad),) + ((0, 0),) * (x.ndim - 1))
    return x


# ---------------- Kernel 1: obj logits + edge representation (one 128-lane slab) ----------------
# slab columns: [0:16] obj_dists, [16:48] edge_ctx, [48:112] edge_rep, rest 0.
# post_emb is folded into (w1, b1), so the kernel is a single matmul + bias.
def _obj_edge_kernel(roi_ref, w1_ref, b1_ref, out_ref):
    out_ref[...] = (jnp.dot(roi_ref[...], w1_ref[...],
                            preferred_element_type=jnp.float32) + b1_ref[...])


def obj_edge_call(roi, w1, b1):
    n = roi.shape[0]
    blk = _row_block(n)
    roi_p = _pad_rows(roi.astype(jnp.bfloat16), blk)
    n_pad = roi_p.shape[0]
    cost = pl.CostEstimate(
        flops=2 * n_pad * IN_CH * LANE,
        transcendentals=0,
        bytes_accessed=(n_pad * IN_CH * 2 + IN_CH * LANE * 2 + LANE * 4
                        + n_pad * LANE * 4))
    out = pl.pallas_call(
        _obj_edge_kernel,
        out_shape=jax.ShapeDtypeStruct((n_pad, LANE), jnp.float32),
        grid=(n_pad // blk,),
        in_specs=[
            pl.BlockSpec((blk, IN_CH), lambda i: (i, 0)),
            pl.BlockSpec((IN_CH, LANE), lambda i: (0, 0)),
            pl.BlockSpec((1, LANE), lambda i: (0, 0)),
        ],
        out_specs=pl.BlockSpec((blk, LANE), lambda i: (i, 0)),
        compiler_params=pltpu.CompilerParams(
            dimension_semantics=("parallel",),
            vmem_limit_bytes=VMEM_LIMIT),
        cost_estimate=cost,
    )(roi_p, w1, b1)
    return out[:n]


def _obj_edge_ref(roi, w1, b1):
    return jnp.dot(roi.astype(jnp.bfloat16), w1, preferred_element_type=jnp.float32) + b1


# ---------------- Kernel 2: relation logits (gathered freq-bias rows added, rel/ctx fused) ----------------
def _rel_dist_kernel(prod_ref, union_ref, freq_ref,
                     w_cat_ref, b_cat_ref, w_rc_ref, b_out_ref, out_ref):
    prod = prod_ref[...]                                                     # [T, 2H] bf16
    # self.post_cat
    ctx_gate = (jnp.dot(prod, w_cat_ref[...], preferred_element_type=jnp.float32)
                + b_cat_ref[...])
    # use_vision and not union_single_not_match -> visual = ctx_gate * union_features
    visual = (ctx_gate * union_ref[...].astype(jnp.float32)).astype(jnp.bfloat16)
    # rel_compress(visual) + ctx_compress(prod) as one K=128 MXU push
    lhs = jnp.concatenate([visual, prod], axis=-1)                           # [T, 128] bf16
    out_ref[...] = (jnp.dot(lhs, w_rc_ref[...], preferred_element_type=jnp.float32)
                    + freq_ref[...] + b_out_ref[...])


def rel_dist_call(prod_rep, union_features, freq_rows, w_cat, b_cat, w_rc, b_out):
    n = prod_rep.shape[0]
    blk = _row_block(n)
    prod_p = _pad_rows(prod_rep.astype(jnp.bfloat16), blk)
    union_p = _pad_rows(union_features.astype(jnp.bfloat16), blk)
    freq_p = _pad_rows(freq_rows.astype(jnp.float32), blk)
    n_pad = prod_p.shape[0]
    cost = pl.CostEstimate(
        flops=2 * n_pad * (2 * HIDDEN_DIM * POOLING_DIM + LANE * LANE),
        transcendentals=0,
        bytes_accessed=(n_pad * 2 * HIDDEN_DIM * 2 + n_pad * POOLING_DIM * 2
                        + n_pad * LANE * 4 + LANE * LANE * 2
                        + 2 * HIDDEN_DIM * POOLING_DIM * 2
                        + n_pad * LANE * 4))
    out = pl.pallas_call(
        _rel_dist_kernel,
        out_shape=jax.ShapeDtypeStruct((n_pad, LANE), jnp.float32),
        grid=(n_pad // blk,),
        in_specs=[
            pl.BlockSpec((blk, 2 * HIDDEN_DIM), lambda i: (i, 0)),
            pl.BlockSpec((blk, POOLING_DIM), lambda i: (i, 0)),
            pl.BlockSpec((blk, LANE), lambda i: (i, 0)),
            pl.BlockSpec((2 * HIDDEN_DIM, POOLING_DIM), lambda i: (0, 0)),
            pl.BlockSpec((1, POOLING_DIM), lambda i: (0, 0)),
            pl.BlockSpec((POOLING_DIM + 2 * HIDDEN_DIM, LANE), lambda i: (0, 0)),
            pl.BlockSpec((1, LANE), lambda i: (0, 0)),
        ],
        out_specs=pl.BlockSpec((blk, LANE), lambda i: (i, 0)),
        compiler_params=pltpu.CompilerParams(
            dimension_semantics=("parallel",),
            vmem_limit_bytes=VMEM_LIMIT),
        cost_estimate=cost,
    )(prod_p, union_p, freq_p, w_cat, b_cat, w_rc, b_out)
    return out[:n, :NUM_REL_CLS]


def _rel_dist_ref(prod_rep, union_features, freq_rows, w_cat, b_cat, w_rc, b_out):
    prod = prod_rep.astype(jnp.bfloat16)
    union = union_features.astype(jnp.bfloat16)
    ctx_gate = jnp.dot(prod, w_cat, preferred_element_type=jnp.float32) + b_cat
    visual = (ctx_gate * union.astype(jnp.float32)).astype(jnp.bfloat16)
    lhs = jnp.concatenate([visual, prod], axis=-1)
    out = jnp.dot(lhs, w_rc, preferred_element_type=jnp.float32) + freq_rows + b_out
    return out[:, :NUM_REL_CLS]


# ---------------- deterministic parameter construction (packed/folded for the kernels) ----------------
def make_params(key):
    ks = jax.random.split(key, 8)

    def xavier(k, fan_in, fan_out):
        std = float(np.sqrt(2.0 / (fan_in + fan_out)))
        return jax.random.normal(k, (fan_in, fan_out), jnp.float32) * std

    # simplified TransformerContext stand-in
    w_obj  = xavier(ks[0], IN_CH, NUM_OBJ_CLS)
    b_obj  = jnp.zeros((NUM_OBJ_CLS,), jnp.float32)
    w_edge = xavier(ks[1], IN_CH, HIDDEN_DIM)
    b_edge = jnp.zeros((HIDDEN_DIM,), jnp.float32)
    # post_emb: layer_init(normal, std = 10 * (1/hidden_dim)**0.5)
    post_std = 10.0 * (1.0 / HIDDEN_DIM) ** 0.5
    w_post = jax.random.normal(ks[2], (HIDDEN_DIM, 2 * HIDDEN_DIM), jnp.float32) * post_std
    b_post = jnp.zeros((2 * HIDDEN_DIM,), jnp.float32)
    # post_cat, rel_compress, ctx_compress: xavier
    w_cat = xavier(ks[3], 2 * HIDDEN_DIM, POOLING_DIM)
    b_cat = jnp.zeros((POOLING_DIM,), jnp.float32)
    w_rel = xavier(ks[4], POOLING_DIM, NUM_REL_CLS)
    b_rel = jnp.zeros((NUM_REL_CLS,), jnp.float32)
    w_ctx = xavier(ks[5], 2 * HIDDEN_DIM, NUM_REL_CLS)
    b_ctx = jnp.zeros((NUM_REL_CLS,), jnp.float32)
    # FrequencyBias embedding table [num_obj_cls**2, num_rel_cls]
    freq = jax.random.normal(ks[6], (NUM_PAIR, NUM_REL_CLS), jnp.float32) * 0.01

    # ---- kernel 1: (W_obj | W_edge) packed into [IN_CH, 128], post_emb constant-folded in ----
    w_fused = jnp.zeros((IN_CH, LANE), jnp.float32)
    w_fused = w_fused.at[:, :NUM_OBJ_CLS].set(w_obj)
    w_fused = w_fused.at[:, NUM_OBJ_CLS:EDGE_OFF].set(w_edge)
    b_fused = jnp.zeros((1, LANE), jnp.float32)
    b_fused = b_fused.at[0, :NUM_OBJ_CLS].set(b_obj)
    b_fused = b_fused.at[0, NUM_OBJ_CLS:EDGE_OFF].set(b_edge)
    # post_emb embedded into a [128,128] map: rows = edge_ctx columns, cols = edge_rep columns
    w_post_full = jnp.zeros((LANE, LANE), jnp.float32)
    w_post_full = w_post_full.at[NUM_OBJ_CLS:EDGE_OFF,
                                 EDGE_OFF:EDGE_OFF + 2 * HIDDEN_DIM].set(w_post)
    b_post_placed = jnp.zeros((1, LANE), jnp.float32)
    b_post_placed = b_post_placed.at[0, EDGE_OFF:EDGE_OFF + 2 * HIDDEN_DIM].set(b_post)
    # fold (linear composition, done in f32 at build time):
    #   slab = roi @ Wf + bf + (roi @ Wf + bf) @ Wp + b_post = roi @ W1 + B1
    w1 = w_fused + jnp.dot(w_fused, w_post_full)
    b1 = b_fused + jnp.dot(b_fused, w_post_full) + b_post_placed

    # ---- kernel 2: rel/ctx weights stacked into one [128,128] rhs, biases combined ----
    w_rel_pad = jnp.zeros((POOLING_DIM, LANE), jnp.float32).at[:, :NUM_REL_CLS].set(w_rel)
    w_ctx_pad = jnp.zeros((2 * HIDDEN_DIM, LANE), jnp.float32).at[:, :NUM_REL_CLS].set(w_ctx)
    w_rc = jnp.concatenate([w_rel_pad, w_ctx_pad], axis=0)          # [128, 128]
    b_out = jnp.zeros((1, LANE), jnp.float32).at[0, :NUM_REL_CLS].set(b_rel + b_ctx)

    # frequency table, lane-padded; rows are gathered in the wrapper (f32-exact)
    freq_pad = jnp.zeros((NUM_PAIR, LANE), jnp.float32)
    if USE_BIAS:
        freq_pad = freq_pad.at[:, :NUM_REL_CLS].set(freq)

    bf = jnp.bfloat16
    return {
        "w1": w1.astype(bf), "b1": b1,
        "w_cat": w_cat.astype(bf), "b_cat": b_cat.reshape(1, -1),
        "w_rc": w_rc.astype(bf), "b_out": b_out,
        "freq_pad": freq_pad,
    }


# ---------------- full forward (mirrors TransformerPredictor.forward) ----------------
def transformer_predictor_forward(params, num_objs, rel_pair_idxs, roi_features,
                                  union_features, use_pallas=True):
    obj_fn = obj_edge_call if use_pallas else _obj_edge_ref
    rel_fn = rel_dist_call if use_pallas else _rel_dist_ref

    # context layer + post_emb -> one [N_obj, 128] slab
    slab = obj_fn(roi_features, params["w1"], params["b1"])
    obj_dists = slab[:, :NUM_OBJ_CLS]
    head_rep = slab[:, EDGE_OFF:EDGE_OFF + HIDDEN_DIM]
    tail_rep = slab[:, EDGE_OFF + HIDDEN_DIM:EDGE_OFF + 2 * HIDDEN_DIM]
    # sgdet-style obj_preds (argmax over non-background classes)
    obj_preds = jnp.argmax(obj_dists[:, 1:], axis=-1) + 1

    # vectorized pair gather: precompute global indices once (host-side, static)
    offsets = np.cumsum([0] + list(num_objs))
    sub_idx = np.concatenate(
        [np.asarray(p)[:, 0] + offsets[i] for i, p in enumerate(rel_pair_idxs)]).astype(np.int32)
    ob_idx = np.concatenate(
        [np.asarray(p)[:, 1] + offsets[i] for i, p in enumerate(rel_pair_idxs)]).astype(np.int32)
    prod_rep = jnp.concatenate([head_rep[sub_idx], tail_rep[ob_idx]], axis=-1)  # [N_rel, 2H]
    freq_idx = obj_preds[sub_idx] * NUM_OBJ_CLS + obj_preds[ob_idx]             # [N_rel]
    freq_rows = params["freq_pad"][freq_idx]                                    # [N_rel, 128] f32 (XLA gather)

    rel_dists = rel_fn(prod_rep, union_features, freq_rows,
                       params["w_cat"], params["b_cat"], params["w_rc"], params["b_out"])

    # per-image splits (obj_dists.split(num_objs), rel_dists.split(num_rels))
    num_rels = [int(np.asarray(p).shape[0]) for p in rel_pair_idxs]
    obj_splits, rel_splits, add_losses = [], [], {}
    o = 0
    for n in num_objs:
        obj_splits.append(obj_dists[o:o + n]); o += n
    r = 0
    for n in num_rels:
        rel_splits.append(rel_dists[r:r + n]); r += n
    return obj_splits, rel_splits, add_losses


if __name__ == "__main__":
    key = jax.random.PRNGKey(0)
    kp, kx, ku = jax.random.split(key, 3)

    params = make_params(kp)

    # two "images": 5 and 3 proposals, 6 and 2 relation pairs
    num_objs = [5, 3]
    n_obj = sum(num_objs)
    rel_pair_idxs = [
        np.array([[0, 1], [1, 2], [2, 3], [3, 4], [4, 0], [1, 3]], dtype=np.int32),
        np.array([[0, 1], [2, 0]], dtype=np.int32),
    ]
    n_rel = sum(int(r.shape[0]) for r in rel_pair_idxs)

    roi_features = jax.random.normal(kx, (n_obj, IN_CH), jnp.float32)
    union_features = jax.random.normal(ku, (n_rel, POOLING_DIM), jnp.float32)

    obj_splits, rel_splits, add_losses = transformer_predictor_forward(
        params, num_objs, rel_pair_idxs, roi_features, union_features, use_pallas=True)
    jax.block_until_ready(obj_splits)
    jax.block_until_ready(rel_splits)

    # pure-JAX reference (same packed/folded bf16 params / same math path)
    ref_obj, ref_rel, _ = transformer_predictor_forward(
        params, num_objs, rel_pair_idxs, roi_features, union_features, use_pallas=False)

    assert len(obj_splits) == 2 and len(rel_splits) == 2
    assert obj_splits[0].shape == (5, NUM_OBJ_CLS) and obj_splits[1].shape == (3, NUM_OBJ_CLS)
    assert rel_splits[0].shape == (6, NUM_REL_CLS) and rel_splits[1].shape == (2, NUM_REL_CLS)
    for a, b in zip(obj_splits + rel_splits, ref_obj + ref_rel):
        np.testing.assert_allclose(np.asarray(a), np.asarray(b), rtol=2e-2, atol=2e-2)
    print("KERNEL_OK")
</pallas_src>

<mosaic_0001>
module attributes {stable_mosaic.version = 11 : i64} {
  func.func @_obj_edge_kernel(%arg0: i32, %arg1: memref<8x64xbf16, #tpu.memory_space<vmem>>, %arg2: memref<64x128xbf16, #tpu.memory_space<vmem>>, %arg3: memref<1x128xf32, #tpu.memory_space<vmem>>, %arg4: memref<8x128xf32, #tpu.memory_space<vmem>>) attributes {dimension_semantics = [#tpu.dimension_semantics<parallel>], iteration_bounds = array<i64: 1>, scalar_prefetch = 0 : i64, scratch_operands = 0 : i64, tpu.core_type = #tpu.core_type<tc>, window_params = [{transform_indices = @transform_0, window_bounds = array<i64: 8, 64>}, {pipeline_mode = #tpu.pipeline_mode<synchronous>, transform_indices = @transform_1, window_bounds = array<i64: 64, 128>}, {pipeline_mode = #tpu.pipeline_mode<synchronous>, transform_indices = @transform_2, window_bounds = array<i64: 1, 128>}, {transform_indices = @transform_3, window_bounds = array<i64: 8, 128>}]} {
    %c0 = arith.constant 0 : index
    %c0_0 = arith.constant 0 : index
    %0 = vector.load %arg1[%c0, %c0_0] : memref<8x64xbf16, #tpu.memory_space<vmem>>, vector<8x64xbf16>
    %c0_1 = arith.constant 0 : index
    %c0_2 = arith.constant 0 : index
    %1 = vector.load %arg2[%c0_1, %c0_2] : memref<64x128xbf16, #tpu.memory_space<vmem>>, vector<64x128xbf16>
    %cst = arith.constant dense<0.000000e+00> : vector<8x128xf32>
    %2 = tpu.matmul %0, %1, %cst {dimension_numbers = #tpu.dot_dimension_numbers<[1], [0], [0], [1], [0, 0, 1, 1], [], []>} : vector<8x64xbf16>, vector<64x128xbf16>, vector<8x128xf32> -> vector<8x128xf32>
    %c0_3 = arith.constant 0 : index
    %c0_4 = arith.constant 0 : index
    %3 = vector.load %arg3[%c0_3, %c0_4] : memref<1x128xf32, #tpu.memory_space<vmem>>, vector<1x128xf32>
    %4 = vector.broadcast %3 : vector<1x128xf32> to vector<8x128xf32>
    %5 = arith.addf %2, %4 : vector<8x128xf32>
    %c0_5 = arith.constant 0 : index
    %c0_6 = arith.constant 0 : index
    %6 = vector.load %arg4[%c0_5, %c0_6] : memref<8x128xf32, #tpu.memory_space<vmem>>, vector<8x128xf32>
    tpu.vector_store %arg4[%c0_5, %c0_6], %5 {strides = array<i32>} : memref<8x128xf32, #tpu.memory_space<vmem>>, vector<8x128xf32>,
    return
  }
  func.func @transform_0(%arg0: i32) -> (i32, i32) {
    %c0_i32 = arith.constant 0 : i32
    %c0_i32_0 = arith.constant 0 : i32
    return %arg0, %c0_i32 : i32, i32
  }
  func.func @transform_1(%arg0: i32) -> (i32, i32) {
    %c0_i32 = arith.constant 0 : i32
    %c0_i32_0 = arith.constant 0 : i32
    %c0_i32_1 = arith.constant 0 : i32
    return %c0_i32, %c0_i32_0 : i32, i32
  }
  func.func @transform_2(%arg0: i32) -> (i32, i32) {
    %c0_i32 = arith.constant 0 : i32
    %c0_i32_0 = arith.constant 0 : i32
    %c0_i32_1 = arith.constant 0 : i32
    return %c0_i32, %c0_i32_0 : i32, i32
  }
  func.func @transform_3(%arg0: i32) -> (i32, i32) {
    %c0_i32 = arith.constant 0 : i32
    %c0_i32_0 = arith.constant 0 : i32
    return %arg0, %c0_i32 : i32, i32
  }
}

</mosaic_0001>

<llo_original>
// kernel: tpu_custom_call.1
$region0: #{tpu_custom_call.1}
  #allocation0 [shape = 'u32[]', space=smem, size = 0x4, offset = 0x4, fixed_abs, tag = 'smem constant byte address 0x4 - core index']
  #allocation1 [shape = 'u32[144,128]{1,0:T(1,128)}', space=vmem, size = 0x12000, scoped, tag = 'internal scratch']
  %s0 = inlined_call_operand.hbm [shape: bf16[8,64], index: 0, kind: input, shape index: {}]
  %s1 = inlined_call_operand.hbm [shape: bf16[64,128], index: 1, kind: input, shape index: {}]
  %s2 = inlined_call_operand.vmem [shape: f32[1,128], index: 2, kind: input, shape index: {}]
  %s3 = inlined_call_operand.hbm [shape: f32[8,128], index: 3, kind: output, shape index: {}]
  %s4 = sld [smem:[#allocation0]]
  $region30: #{tpu_custom_call.1} parent=0
    _
  %s6 = ssub.s32 1, %s4
  %s7 = scalar_select 0, %s6, %s4
  $region1: #{tpu_custom_call.1} parent=0
    #allocation2 [shape = 'u8[2048]{0}', space=vmem, size = 0x800, scoped, tag = 'input window, operand 0, single buffered']
    #allocation3 [shape = 's32[1]{0}', space=sflag, size = 0x4, scoped, tag = 'scoped memory for tpu_custom_call.1']
    #allocation4 [shape = 's32[1]{0}', space=sflag, size = 0x4, scoped, tag = 'scoped memory for tpu_custom_call.1']
    #allocation5 [shape = 'u8[16384]{0}', space=vmem, size = 0x4000, scoped, tag = 'input window, operand 1, single buffered']
    #allocation6 [shape = 's32[1]{0}', space=sflag, size = 0x4, scoped, tag = 'scoped memory for tpu_custom_call.1']
    #allocation7 [shape = 'u8[4096]{0}', space=vmem, size = 0x1000, scoped, tag = 'output window, operand 0, single buffered']
    %8 = vsyncpa [#allocation3], 0
    %9 = vsyncpa [#allocation6], 0
    %10 = vsyncpa [#allocation4], 0
    // Predicated region
    $region2: #{tpu_custom_call.1} parent=1 // pred_check
      _
    $region3: #{tpu_custom_call.1} parent=1 // pred_check_branch
      %12 = sbr.rel (0) target = $region5
    $region4: #{tpu_custom_call.1} parent=1 // pred_region
      %s14 = ssub.s32 64, 64
      %15 = vsyncadd [#allocation3], %s14
      %s17 = sshll.u32 [#allocation2], 4
      %s18 = int_to_ptr.vmem [resolvable:$true] %s17
      %20 = dma.hbm_to_vmem [thread:$0]  %s0, 64, %s18, [#allocation3]
    $region5: #{tpu_custom_call.1} parent=1 // pred_fallthru
      _
    // Predicated region
    $region6: #{tpu_custom_call.1} parent=1 // pred_check
      _
    $region7: #{tpu_custom_call.1} parent=1 // pred_check_branch
      %22 = sbr.rel (0) target = $region9
    $region8: #{tpu_custom_call.1} parent=1 // pred_region
      %s24 = ssub.s32 512, 512
      %25 = vsyncadd [#allocation6], %s24
      %s26 = sshll.u32 [#allocation5], 4
      %s27 = int_to_ptr.vmem [resolvable:$true] %s26
      %32 = dma.hbm_to_vmem [thread:$0]  %s1, 512, %s27, [#allocation6], 64, 64, 4
    $region9: #{tpu_custom_call.1} parent=1 // pred_fallthru
      _
    // Predicated region
    $region10: #{tpu_custom_call.1} parent=1 // pred_check
      _
    $region11: #{tpu_custom_call.1} parent=1 // pred_check_branch
      %34 = sbr.rel (0) target = $region13
    $region12: #{tpu_custom_call.1} parent=1 // pred_region
      _
    $region13: #{tpu_custom_call.1} parent=1 // pred_fallthru
      _
    // Predicated region
    $region14: #{tpu_custom_call.1} parent=1 // pred_check
      _
    $region15: #{tpu_custom_call.1} parent=1 // pred_check_branch
      %36 = sbr.rel (0) target = $region17
    $region16: #{tpu_custom_call.1} parent=1 // pred_region
      %37 = dma.done [#allocation3], 64
    $region17: #{tpu_custom_call.1} parent=1 // pred_fallthru
      _
    // Predicated region
    $region18: #{tpu_custom_call.1} parent=1 // pred_check
      _
    $region19: #{tpu_custom_call.1} parent=1 // pred_check_branch
      %39 = sbr.rel (0) target = $region21
    $region20: #{tpu_custom_call.1} parent=1 // pred_region
      %40 = dma.done [#allocation6], 512
    $region21: #{tpu_custom_call.1} parent=1 // pred_fallthru
      _
    %v42 = vld [vmem:[#allocation2] sm:$0xf]
    %v43 = vld [vmem:[#allocation5] sm:$0xf]
    %v44 = vld [vmem:[#allocation5 + $0x4] sm:$0xf]
    %v45 = vld [vmem:[#allocation5 + $0x8] sm:$0xf]
    %v46 = vld [vmem:[#allocation5 + $0xc] sm:$0xf]
    %v47 = vld [vmem:[#allocation5 + $0x10] sm:$0xf]
    %v48 = vld [vmem:[#allocation5 + $0x14] sm:$0xf]
    %v49 = vld [vmem:[#allocation5 + $0x18] sm:$0xf]
    %v50 = vld [vmem:[#allocation5 + $0x1c] sm:$0xf]
    %v51 = vld [vmem:[%s2] sm:$0x1]
    %v53 = vlaneseq
    %v54 = vshrl.u32 %v53, 7
    %v55 = vsub.s32 0, %v54
    %v56 = vrot.slane %v51, %v55
    %v66 = vunpack.c.l.b16 %v43
    %v67 = vunpack.c.l.b16 %v44
    %v68 = vunpack.c.l.b16 %v45
    %v69 = vunpack.c.l.b16 %v46
    %v70 = vunpack.c.l.b16 %v47
    %v71 = vunpack.c.l.b16 %v48
    %v72 = vunpack.c.l.b16 %v49
    %v73 = vunpack.c.l.b16 %v50
    %v74 = vpack.c.b16 %v67, %v66
    %v75 = vpack.c.b16 %v69, %v68
    %v76 = vpack.c.b16 %v71, %v70
    %v77 = vpack.c.b16 %v73, %v72
    %vm82 = vcmask 523264
    %v84 = vsel %vm82, %v42, 0
    %86 = vmatprep.subr.bf16.mxu0 0
    %87 = vmatpush1.bf16.msra.mxu0 %v74
    %88 = vmatprep.subr.bf16.mxu0 0
    %89 = vmatpush1.bf16.msra.mxu0 %v75
    %90 = vmatprep.subr.bf16.mxu0 0
    %91 = vmatpush1.bf16.msra.mxu0 %v76
    %92 = vmatprep.subr.bf16.mxu0 0
    %93 = vmatpush1.bf16.msra.mxu0 %v77
    %94 = vmatprep.subr.bf16.mxu0 0
    %95 = vmatpush1.bf16.msra.mxu0 0
    %96 = vmatprep.subr.bf16.mxu0 0
    %97 = vmatpush1.bf16.msra.mxu0 0
    %98 = vmatprep.subr.bf16.mxu0 0
    %99 = vmatpush1.bf16.msra.mxu0 0
    %100 = vmatprep.subr.bf16.mxu0 0
    %101 = vmatpush1.bf16.msra.mxu0 0
    %102 = vmatprep.subr.bf16.mxu0 0
    %103 = vmatpush1.bf16.msra.mxu0 0
    %104 = vmatprep.subr.bf16.mxu0 0
    %105 = vmatpush1.bf16.msra.mxu0 0
    %106 = vmatprep.subr.bf16.mxu0 0
    %107 = vmatpush1.bf16.msra.mxu0 0
    %108 = vmatprep.subr.bf16.mxu0 0
    %109 = vmatpush1.bf16.msra.mxu0 0
    %110 = vmatprep.subr.bf16.mxu0 0
    %111 = vmatpush1.bf16.msra.mxu0 0
    %112 = vmatprep.subr.bf16.mxu0 0
    %113 = vmatpush1.bf16.msra.mxu0 0
    %114 = vmatprep.subr.bf16.mxu0 0
    %115 = vmatpush1.bf16.msra.mxu0 0
    %116 = vmatprep.subr.bf16.mxu0 0
    %117 = vmatpush1.bf16.msra.mxu0 0
    %118 = vmatprep.mubr.bf16.mxu0 0
    %119 = vmatmul.mubr.bf16.gmra.mrb[0].mxu0 %v84
    %v120 = vpop.f32.mrb[0].mxu0
    %v121 = vadd.f32 %v56, %v120
    %v122 = vpop.f32.mrb[0].mxu0
    %v123 = vpop.f32.mrb[0].mxu0
    %v124 = vpop.f32.mrb[0].mxu0
    %125 = vdwg.mxu0
    %126 = vst [vmem:[#allocation7] sm:$0xff] %v121
    // Predicated region
    $region22: #{tpu_custom_call.1} parent=1 // pred_check
      _
    $region23: #{tpu_custom_call.1} parent=1 // pred_check_branch
      %128 = sbr.rel (0) target = $region25
    $region24: #{tpu_custom_call.1} parent=1 // pred_region
      %s130 = ssub.s32 128, 128
      %131 = vsyncadd [#allocation4], %s130
      %s133 = sshll.u32 [#allocation7], 4
      %s134 = int_to_ptr.vmem [resolvable:$true] %s133
      %136 = dma.vmem_to_hbm [thread:$0]  %s134, 128, %s3, [#allocation4]
    $region25: #{tpu_custom_call.1} parent=1 // pred_fallthru
      _
    // Predicated region
    $region26: #{tpu_custom_call.1} parent=1 // pred_check
      _
    $region27: #{tpu_custom_call.1} parent=1 // pred_check_branch
      %138 = sbr.rel (0) target = $region29
    $region28: #{tpu_custom_call.1} parent=1 // pred_region
      %139 = dma.done [#allocation4], 128
    $region29: #{tpu_custom_call.1} parent=1 // pred_fallthru
      _
    %140 = vsyncpa [#allocation3], 1
    %141 = vsyncpa [#allocation6], 1
    %142 = vsyncpa [#allocation4], 1

</llo_original>
